<compile_context>
chip_gen: v7x
topology: tpu7x:2x2x1
jax: 0.10.0
libtpu: 0.0.40
codegen_flags: <defaults>
</compile_context>

<pallas_src>
import jax
import jax.numpy as jnp
from jax.experimental import pallas as pl
from jax.experimental.pallas import tpu as pltpu

LANES = 128
SUBLANES = 8


def perceptron_kernel(params_ref, xt_ref, o_ref):
    """Fused Linear(2,2) -> Linear(2,1) -> Sigmoid on one dense batch tile.

    xt_ref    : (2, TILE_ROWS, 128) f32 -- feature f of sample s lives at
                xt_ref[f, s // 128, s % 128] (batch dense on sublanes+lanes).
    o_ref     : (TILE_ROWS, 128) f32    -- sublane/lane-dense output tile.
    params_ref: (3,) f32 in SMEM        -- folded affine map [a0, a1, c] with
                a = W2 @ W1 and c = W2 @ b1 + b2.
    """
    x0 = xt_ref[0]                      # (TILE_ROWS, 128)
    x1 = xt_ref[1]                      # (TILE_ROWS, 128)

    a0 = params_ref[0]
    a1 = params_ref[1]
    c = params_ref[2]

    # fc2(fc1(x)) folded to a single affine map: pure VPU FMAs, hidden by DMA.
    z = x0 * a0 + x1 * a1 + c
    # Exact sigmoid: exp (EUP) + exact reciprocal; kernel is memory-bound so
    # the extra accuracy is free in wall-clock.
    o_ref[...] = pl.reciprocal(1.0 + jnp.exp(-z), approx=False).astype(o_ref.dtype)


def perceptron_forward(x, w1, b1, w2, b2, *, max_tile_rows=2048):
    """x: (N, 2); w1: (2,2); b1: (2,); w2: (1,2); b2: (1,)  ->  (N, 1) f32.

    Weight shapes follow the PyTorch nn.Linear convention (W is (out, in)).
    """
    n = x.shape[0]

    # ---- tiling: batch packed densely into (rows, 128) f32 tiles -------------
    rows = pl.cdiv(n, LANES)
    if rows <= SUBLANES:
        # Tiny batch: one full-extent block (allowed even when rows % 8 != 0).
        tile_rows = rows
    else:
        rows = pl.cdiv(rows, SUBLANES) * SUBLANES
        # Keep >= 2 grid steps so v7x megacore can shard the "parallel" axis,
        # and cap tile_rows so the double-buffered footprint stays ~6 MiB
        # (2 MiB in + 1 MiB out per step, x2 buffers) -- fits v5e's 16 MiB
        # scoped-VMEM default and v7x's 32 MiB scoped / 64 MiB physical VMEM.
        tile_rows = min(max_tile_rows, pl.cdiv(rows, 2))
        tile_rows = pl.cdiv(tile_rows, SUBLANES) * SUBLANES
        rows = pl.cdiv(rows, tile_rows) * tile_rows
    n_pad = rows * LANES
    grid = (rows // tile_rows,)

    # ---- single fused relayout: (N, 2) -> (2, rows, 128) ---------------------
    x_pad = jnp.pad(x.astype(jnp.float32), ((0, n_pad - n), (0, 0)))
    xt = x_pad.T.reshape(2, rows, LANES)

    # ---- fold fc1/fc2 into one affine map: z = a0*x0 + a1*x1 + c -------------
    w1f = jnp.asarray(w1, jnp.float32).reshape(2, 2)
    b1f = jnp.asarray(b1, jnp.float32).reshape(2)
    w2f = jnp.asarray(w2, jnp.float32).reshape(1, 2)
    b2f = jnp.asarray(b2, jnp.float32).reshape(1)
    a = (w2f @ w1f).reshape(-1)                 # (2,)
    c = w2f @ b1f + b2f                         # (1,)
    params = jnp.concatenate([a, c])            # (3,) scalars -> SMEM

    out = pl.pallas_call(
        perceptron_kernel,
        out_shape=jax.ShapeDtypeStruct((rows, LANES), jnp.float32),
        grid=grid,
        in_specs=[
            pl.BlockSpec(memory_space=pltpu.MemorySpace.SMEM),          # params
            pl.BlockSpec((2, tile_rows, LANES), lambda i: (0, i, 0)),   # x slab
        ],
        out_specs=pl.BlockSpec((tile_rows, LANES), lambda i: (i, 0)),   # dense out
        compiler_params=pltpu.CompilerParams(
            dimension_semantics=("parallel",)),
    )(params, xt)

    return out.reshape(-1)[:n].reshape(n, 1)


if __name__ == "__main__":
    key = jax.random.PRNGKey(0)
    kx, k1, kb1, k2, kb2 = jax.random.split(key, 5)

    # Batch of 30 to match the np.linspace(-6, 6, 30) scale in the spec;
    # 2 input features as required by fc1 = nn.Linear(2, 2).
    N = 30
    x = jax.random.normal(kx, (N, 2), dtype=jnp.float32)
    w1 = jax.random.uniform(k1, (2, 2), minval=-0.7, maxval=0.7, dtype=jnp.float32)
    b1 = jax.random.uniform(kb1, (2,), minval=-0.7, maxval=0.7, dtype=jnp.float32)
    w2 = jax.random.uniform(k2, (1, 2), minval=-0.7, maxval=0.7, dtype=jnp.float32)
    b2 = jax.random.uniform(kb2, (1,), minval=-0.7, maxval=0.7, dtype=jnp.float32)

    out = jax.block_until_ready(perceptron_forward(x, w1, b1, w2, b2))
    ref = jax.nn.sigmoid((x @ w1.T + b1) @ w2.T + b2)
    assert out.shape == (N, 1)
    assert jnp.allclose(out, ref, atol=1e-5, rtol=1e-5), "mismatch vs reference (small)"

    # Also exercise the multi-step (megacore-shardable) tiled grid path.
    N2 = 3000
    x2 = jax.random.normal(jax.random.PRNGKey(1), (N2, 2), dtype=jnp.float32)
    out2 = jax.block_until_ready(perceptron_forward(x2, w1, b1, w2, b2))
    ref2 = jax.nn.sigmoid((x2 @ w1.T + b1) @ w2.T + b2)
    assert out2.shape == (N2, 1)
    assert jnp.allclose(out2, ref2, atol=1e-5, rtol=1e-5), "mismatch vs reference (tiled)"

    print("KERNEL_OK")
</pallas_src>

<mosaic_0001>
module attributes {stable_mosaic.version = 11 : i64} {
  func.func @perceptron_kernel(%arg0: i32, %arg1: memref<3xf32, #tpu.memory_space<smem>>, %arg2: memref<2x1x128xf32, #tpu.memory_space<vmem>>, %arg3: memref<1x128xf32, #tpu.memory_space<vmem>>) attributes {dimension_semantics = [#tpu.dimension_semantics<parallel>], iteration_bounds = array<i64: 1>, scalar_prefetch = 0 : i64, scratch_operands = 0 : i64, tpu.core_type = #tpu.core_type<tc>, window_params = [{transform_indices = @transform_0, window_bounds = array<i64: 3>}, {transform_indices = @transform_1, window_bounds = array<i64: 2, 1, 128>}, {transform_indices = @transform_2, window_bounds = array<i64: 1, 128>}]} {
    %c0 = arith.constant 0 : index
    %c0_0 = arith.constant 0 : index
    %c0_1 = arith.constant 0 : index
    %0 = vector.load %arg2[%c0, %c0_0, %c0_1] : memref<2x1x128xf32, #tpu.memory_space<vmem>>, vector<1x1x128xf32>
    %1 = vector.shape_cast %0 : vector<1x1x128xf32> to vector<1x128xf32>
    %c1 = arith.constant 1 : index
    %c0_2 = arith.constant 0 : index
    %c0_3 = arith.constant 0 : index
    %2 = vector.load %arg2[%c1, %c0_2, %c0_3] : memref<2x1x128xf32, #tpu.memory_space<vmem>>, vector<1x1x128xf32>
    %3 = vector.shape_cast %2 : vector<1x1x128xf32> to vector<1x128xf32>
    %c0_4 = arith.constant 0 : index
    %4 = memref.load %arg1[%c0_4] : memref<3xf32, #tpu.memory_space<smem>>
    %c1_5 = arith.constant 1 : index
    %5 = memref.load %arg1[%c1_5] : memref<3xf32, #tpu.memory_space<smem>>
    %c2 = arith.constant 2 : index
    %6 = memref.load %arg1[%c2] : memref<3xf32, #tpu.memory_space<smem>>
    %7 = vector.broadcast %4 : f32 to vector<1x128xf32>
    %8 = arith.mulf %1, %7 : vector<1x128xf32>
    %9 = vector.broadcast %5 : f32 to vector<1x128xf32>
    %10 = arith.mulf %3, %9 : vector<1x128xf32>
    %11 = arith.addf %8, %10 : vector<1x128xf32>
    %12 = vector.broadcast %6 : f32 to vector<1x128xf32>
    %13 = arith.addf %11, %12 : vector<1x128xf32>
    %cst = arith.constant 0.000000e+00 : f32
    %14 = vector.broadcast %cst : f32 to vector<1x128xf32>
    %15 = arith.subf %14, %13 : vector<1x128xf32>
    %16 = math.exp %15 : vector<1x128xf32>
    %cst_6 = arith.constant 1.000000e+00 : f32
    %17 = vector.broadcast %cst_6 : f32 to vector<1x128xf32>
    %18 = arith.addf %17, %16 : vector<1x128xf32>
    %19 = tpu.reciprocal %18 : vector<1x128xf32> -> vector<1x128xf32>
    %c0_7 = arith.constant 0 : index
    %c0_8 = arith.constant 0 : index
    %20 = vector.load %arg3[%c0_7, %c0_8] : memref<1x128xf32, #tpu.memory_space<vmem>>, vector<1x128xf32>
    tpu.vector_store %arg3[%c0_7, %c0_8], %19 {strides = array<i32>} : memref<1x128xf32, #tpu.memory_space<vmem>>, vector<1x128xf32>,
    return
  }
  func.func @transform_0(%arg0: i32) -> i32 {
    %c0_i32 = arith.constant 0 : i32
    %c0_i32_0 = arith.constant 0 : i32
    return %c0_i32 : i32
  }
  func.func @transform_1(%arg0: i32) -> (i32, i32, i32) {
    %c0_i32 = arith.constant 0 : i32
    %c0_i32_0 = arith.constant 0 : i32
    %c0_i32_1 = arith.constant 0 : i32
    return %c0_i32, %arg0, %c0_i32_0 : i32, i32, i32
  }
  func.func @transform_2(%arg0: i32) -> (i32, i32) {
    %c0_i32 = arith.constant 0 : i32
    %c0_i32_0 = arith.constant 0 : i32
    return %arg0, %c0_i32 : i32, i32
  }
}

</mosaic_0001>

<llo_original>
// kernel: tpu_custom_call.1
$region0: #{tpu_custom_call.1}
  #allocation0 [shape = 'u32[]', space=smem, size = 0x4, offset = 0x4, fixed_abs, tag = 'smem constant byte address 0x4 - core index']
  #allocation1 [shape = 'u32[144,128]{1,0:T(1,128)}', space=vmem, size = 0x12000, scoped, tag = 'internal scratch']
  %s0 = inlined_call_operand.hbm [shape: f32[3], index: 0, kind: input, shape index: {}]
  %s1 = inlined_call_operand.vmem [shape: f32[2,1,128], index: 1, kind: input, shape index: {}]
  %s2 = inlined_call_operand.hbm [shape: f32[1,128], index: 2, kind: output, shape index: {}]
  %s3 = sld [smem:[#allocation0]]
  $region22: #{tpu_custom_call.1} parent=0
    _
  %s5 = ssub.s32 1, %s3
  %s6 = scalar_select 0, %s5, %s3
  $region1: #{tpu_custom_call.1} parent=0
    #allocation2 [shape = 'u8[512]{0}', space=smem, size = 0x200, scoped, tag = 'input window, operand 0, single buffered']
    #allocation3 [shape = 's32[1]{0}', space=sflag, size = 0x4, scoped, tag = 'scoped memory for tpu_custom_call.1']
    #allocation4 [shape = 's32[1]{0}', space=sflag, size = 0x4, scoped, tag = 'scoped memory for tpu_custom_call.1']
    #allocation5 [shape = 'u8[512]{0}', space=vmem, size = 0x400, scoped, tag = 'output window, operand 0, single buffered']
    %7 = vsyncpa [#allocation4], 0
    %8 = vsyncpa [#allocation3], 0
    // Predicated region
    $region2: #{tpu_custom_call.1} parent=1 // pred_check
      _
    $region3: #{tpu_custom_call.1} parent=1 // pred_check_branch
      %10 = sbr.rel (0) target = $region5
    $region4: #{tpu_custom_call.1} parent=1 // pred_region
      %s12 = ssub.s32 16, 16
      %13 = vsyncadd [#allocation4], %s12
      %16 = dma.hbm_to_smem %s0, 16, [#allocation2], [#allocation4]
    $region5: #{tpu_custom_call.1} parent=1 // pred_fallthru
      _
    // Predicated region
    $region6: #{tpu_custom_call.1} parent=1 // pred_check
      _
    $region7: #{tpu_custom_call.1} parent=1 // pred_check_branch
      %18 = sbr.rel (0) target = $region9
    $region8: #{tpu_custom_call.1} parent=1 // pred_region
      _
    $region9: #{tpu_custom_call.1} parent=1 // pred_fallthru
      _
    // Predicated region
    $region10: #{tpu_custom_call.1} parent=1 // pred_check
      _
    $region11: #{tpu_custom_call.1} parent=1 // pred_check_branch
      %20 = sbr.rel (0) target = $region13
    $region12: #{tpu_custom_call.1} parent=1 // pred_region
      %21 = dma.done [#allocation4], 16
    $region13: #{tpu_custom_call.1} parent=1 // pred_fallthru
      _
    %22 = sfence
    %v23 = vld [vmem:[%s1] sm:$0x1]
    %s24 = scalar_lea.vmem %s1, 1
    %v25 = vld [vmem:[%s24] sm:$0x1]
    %s26 = sld [smem:[#allocation2]]
    %s27 = sld [smem:[#allocation2 + $0x1]]
    %s28 = sld [smem:[#allocation2 + $0x2]]
    %v29 = vstv %s26
    %v30 = vmul.f32 %v23, %v29
    %v31 = vstv %s27
    %v32 = vmul.f32 %v25, %v31
    %v33 = vadd.f32 %v30, %v32
    %v34 = vstv %s28
    %v35 = vadd.f32 %v33, %v34
    %v36 = vsub.f32 0.0, %v35
    %v37 = vmul.f32 %v36, 1.442695
    %v38 = vpow.pop %v37
    %v39 = vadd.f32 %v38, 1.0
    %v40 = vrcp.pop %v39
    %41 = vst [vmem:[#allocation5] sm:$0x1] %v40
    // Predicated region
    $region14: #{tpu_custom_call.1} parent=1 // pred_check
      _
    $region15: #{tpu_custom_call.1} parent=1 // pred_check_branch
      %43 = sbr.rel (0) target = $region17
    $region16: #{tpu_custom_call.1} parent=1 // pred_region
      %s45 = ssub.s32 16, 16
      %46 = vsyncadd [#allocation3], %s45
      %s48 = sshll.u32 [#allocation5], 4
      %s49 = int_to_ptr.vmem [resolvable:$true] %s48
      %51 = dma.vmem_to_hbm [thread:$0]  %s49, 16, %s2, [#allocation3]
    $region17: #{tpu_custom_call.1} parent=1 // pred_fallthru
      _
    // Predicated region
    $region18: #{tpu_custom_call.1} parent=1 // pred_check
      _
    $region19: #{tpu_custom_call.1} parent=1 // pred_check_branch
      %53 = sbr.rel (0) target = $region21
    $region20: #{tpu_custom_call.1} parent=1 // pred_region
      %54 = dma.done [#allocation3], 16
    $region21: #{tpu_custom_call.1} parent=1 // pred_fallthru
      _
    %55 = vsyncpa [#allocation3], 1
    %56 = vsyncpa [#allocation4], 1

</llo_original>
